<compile_context>
chip_gen: v7x
topology: tpu7x:2x2x1
jax: 0.10.0
libtpu: 0.0.40
codegen_flags: <defaults>
</compile_context>

<pallas_src>
import jax
import jax.numpy as jnp
from jax.experimental import pallas as pl
from jax.experimental.pallas import tpu as pltpu

EPS = 1e-5
LANE = 128


# ---------------------------------------------------------------------------
# Fused kernel
# ---------------------------------------------------------------------------
def _projector_kernel(x_ref,
                      w1_ref, g1_ref, be1_ref,
                      w2_ref, g2_ref, be2_ref,
                      w3_ref, g3_ref, be3_ref,
                      o_ref):
    """(Linear + BN(train) + ReLU) x 2  +  (Linear + BN(train)), all in VMEM."""

    def layer(h, w_ref, g_ref, be_ref, relu):
        # Linear on the MXU.  Bias intentionally omitted: BN's mean
        # subtraction cancels it exactly.
        y = jnp.dot(h, w_ref[...], preferred_element_type=jnp.float32)

        # BatchNorm1d (training mode): batch mean, biased variance (ddof=0),
        # computed in a single pass via sum and sum-of-squares.
        inv_n = 1.0 / y.shape[0]
        mean = jnp.sum(y, axis=0, keepdims=True) * inv_n            # (1, D)
        mean_sq = jnp.sum(y * y, axis=0, keepdims=True) * inv_n     # (1, D)
        var = mean_sq - mean * mean                                 # (1, D)

        # Fold gamma into rsqrt, fold (beta - mean*scale) into a shift, then
        # apply a single broadcasted FMA over the (B, D) tile.
        scale = jax.lax.rsqrt(var + EPS) * g_ref[...]               # (1, D)
        shift = be_ref[...] - mean * scale                          # (1, D)
        out = y * scale + shift
        if relu:
            out = jnp.maximum(out, 0.0)
        return out

    h = x_ref[...].astype(jnp.float32)
    h = layer(h, w1_ref, g1_ref, be1_ref, relu=True)
    h = layer(h, w2_ref, g2_ref, be2_ref, relu=True)
    o_ref[...] = layer(h, w3_ref, g3_ref, be3_ref, relu=False)


# ---------------------------------------------------------------------------
# Wrapper: lane-padding + single pallas_call
# ---------------------------------------------------------------------------
def _round_up(d, m=LANE):
    return ((d + m - 1) // m) * m


def _pad2d(a, rows, cols):
    return jnp.pad(a, ((0, rows - a.shape[0]), (0, cols - a.shape[1])))


def _pad_vec(v, cols):
    # (D,) -> (1, cols)  zero-padded
    return jnp.pad(v.reshape(1, -1), ((0, 0), (0, cols - v.shape[0])))


@jax.jit
def projector_forward(params, x):
    """Fused SimCLR-v2 projector forward.  x: (B, in_dim) f32."""
    B, din = x.shape
    hid = params["w1"].shape[1]
    dout = params["w3"].shape[1]
    din_p, hid_p, dout_p = _round_up(din), _round_up(hid), _round_up(dout)

    # Zero-pad features to 128-lane multiples.  Padded columns stay exactly
    # zero through every layer (zero weight cols -> y=0, mean=0, var=0,
    # gamma pad=0 -> scale=0, beta pad=0 -> shift=0 -> out=0), so the math in
    # the valid columns is unchanged.
    xp = _pad2d(x, B, din_p)
    w1p = _pad2d(params["w1"], din_p, hid_p)
    w2p = _pad2d(params["w2"], hid_p, hid_p)
    w3p = _pad2d(params["w3"], hid_p, dout_p)
    g1p, be1p = _pad_vec(params["g1"], hid_p), _pad_vec(params["be1"], hid_p)
    g2p, be2p = _pad_vec(params["g2"], hid_p), _pad_vec(params["be2"], hid_p)
    g3p, be3p = _pad_vec(params["g3"], dout_p), _pad_vec(params["be3"], dout_p)

    vmem = pl.BlockSpec(memory_space=pltpu.MemorySpace.VMEM)
    out_p = pl.pallas_call(
        _projector_kernel,
        out_shape=jax.ShapeDtypeStruct((B, dout_p), jnp.float32),
        in_specs=[vmem] * 10,
        out_specs=vmem,
    )(xp, w1p, g1p, be1p, w2p, g2p, be2p, w3p, g3p, be3p)

    return out_p[:, :dout]


# ---------------------------------------------------------------------------
# Parameter init (matches nn.Linear / nn.BatchNorm1d defaults)
# ---------------------------------------------------------------------------
def init_linear(key, in_dim, out_dim):
    kw, kb = jax.random.split(key)
    bound = 1.0 / jnp.sqrt(jnp.float32(in_dim))
    # Stored transposed, (in_dim, out_dim), so the kernel does x @ W.
    w = jax.random.uniform(kw, (in_dim, out_dim), jnp.float32, -bound, bound)
    b = jax.random.uniform(kb, (out_dim,), jnp.float32, -bound, bound)
    return w, b


def init_bn(out_dim):
    return jnp.ones((out_dim,), jnp.float32), jnp.zeros((out_dim,), jnp.float32)


def make_projector_params(key, in_dim, hidden_dim, out_dim):
    k1, k2, k3 = jax.random.split(key, 3)
    w1, b1 = init_linear(k1, in_dim, hidden_dim)
    g1, be1 = init_bn(hidden_dim)
    w2, b2 = init_linear(k2, hidden_dim, hidden_dim)
    g2, be2 = init_bn(hidden_dim)
    w3, b3 = init_linear(k3, hidden_dim, out_dim)
    g3, be3 = init_bn(out_dim)
    return dict(w1=w1, b1=b1, g1=g1, be1=be1,
                w2=w2, b2=b2, g2=g2, be2=be2,
                w3=w3, b3=b3, g3=g3, be3=be3)


# ---------------------------------------------------------------------------
# Pure-JAX reference (keeps the Linear bias; BN cancels it, so it must match)
# ---------------------------------------------------------------------------
def projector_reference(params, x):
    def layer(h, w, b, g, be, relu):
        y = h @ w + b
        mean = y.mean(axis=0, keepdims=True)
        var = ((y - mean) ** 2).mean(axis=0, keepdims=True)
        out = (y - mean) / jnp.sqrt(var + EPS) * g + be
        return jnp.maximum(out, 0.0) if relu else out

    h = layer(x, params["w1"], params["b1"], params["g1"], params["be1"], True)
    h = layer(h, params["w2"], params["b2"], params["g2"], params["be2"], True)
    return layer(h, params["w3"], params["b3"], params["g3"], params["be3"], False)


if __name__ == "__main__":
    # Small shapes: batch=8, in_dim=32, hidden=64, out_dim=32.
    B, IN_DIM, HIDDEN, OUT_DIM = 8, 32, 64, 32

    key = jax.random.PRNGKey(0)
    kx, kp = jax.random.split(key)
    x = jax.random.normal(kx, (B, IN_DIM), jnp.float32)
    params = make_projector_params(kp, IN_DIM, HIDDEN, OUT_DIM)

    out = projector_forward(params, x)
    out = jax.block_until_ready(out)

    ref = projector_reference(params, x)
    assert out.shape == (B, OUT_DIM)
    assert jnp.allclose(out, ref, atol=1e-4, rtol=1e-4), "mismatch vs reference"

    print("KERNEL_OK")
</pallas_src>

<mosaic_0001>
module attributes {stable_mosaic.version = 11 : i64} {
  func.func @_projector_kernel(%arg0: memref<8x128xf32, #tpu.memory_space<vmem>>, %arg1: memref<128x128xf32, #tpu.memory_space<vmem>>, %arg2: memref<1x128xf32, #tpu.memory_space<vmem>>, %arg3: memref<1x128xf32, #tpu.memory_space<vmem>>, %arg4: memref<128x128xf32, #tpu.memory_space<vmem>>, %arg5: memref<1x128xf32, #tpu.memory_space<vmem>>, %arg6: memref<1x128xf32, #tpu.memory_space<vmem>>, %arg7: memref<128x128xf32, #tpu.memory_space<vmem>>, %arg8: memref<1x128xf32, #tpu.memory_space<vmem>>, %arg9: memref<1x128xf32, #tpu.memory_space<vmem>>, %arg10: memref<8x128xf32, #tpu.memory_space<vmem>>) attributes {dimension_semantics = [], scalar_prefetch = 0 : i64, scratch_operands = 0 : i64, tpu.core_type = #tpu.core_type<tc>} {
    %c0 = arith.constant 0 : index
    %c0_0 = arith.constant 0 : index
    %0 = vector.load %arg0[%c0, %c0_0] : memref<8x128xf32, #tpu.memory_space<vmem>>, vector<8x128xf32>
    %c0_1 = arith.constant 0 : index
    %c0_2 = arith.constant 0 : index
    %1 = vector.load %arg1[%c0_1, %c0_2] : memref<128x128xf32, #tpu.memory_space<vmem>>, vector<128x128xf32>
    %cst = arith.constant dense<0.000000e+00> : vector<8x128xf32>
    %2 = tpu.matmul %0, %1, %cst {dimension_numbers = #tpu.dot_dimension_numbers<[1], [0], [0], [1], [0, 0, 1, 1], [], []>} : vector<8x128xf32>, vector<128x128xf32>, vector<8x128xf32> -> vector<8x128xf32>
    %cst_3 = arith.constant dense<0.000000e+00> : vector<128xf32>
    %3 = vector.multi_reduction <add>, %2, %cst_3 [0] : vector<8x128xf32> to vector<128xf32>
    %4 = vector.shape_cast %3 : vector<128xf32> to vector<1x128xf32>
    %cst_4 = arith.constant 1.250000e-01 : f32
    %5 = vector.broadcast %cst_4 : f32 to vector<1x128xf32>
    %6 = arith.mulf %4, %5 : vector<1x128xf32>
    %7 = arith.mulf %2, %2 : vector<8x128xf32>
    %cst_5 = arith.constant dense<0.000000e+00> : vector<128xf32>
    %8 = vector.multi_reduction <add>, %7, %cst_5 [0] : vector<8x128xf32> to vector<128xf32>
    %9 = vector.shape_cast %8 : vector<128xf32> to vector<1x128xf32>
    %cst_6 = arith.constant 1.250000e-01 : f32
    %10 = vector.broadcast %cst_6 : f32 to vector<1x128xf32>
    %11 = arith.mulf %9, %10 : vector<1x128xf32>
    %12 = arith.mulf %6, %6 : vector<1x128xf32>
    %13 = arith.subf %11, %12 : vector<1x128xf32>
    %cst_7 = arith.constant 9.99999974E-6 : f32
    %14 = vector.broadcast %cst_7 : f32 to vector<1x128xf32>
    %15 = arith.addf %13, %14 : vector<1x128xf32>
    %16 = math.rsqrt %15 : vector<1x128xf32>
    %c0_8 = arith.constant 0 : index
    %c0_9 = arith.constant 0 : index
    %17 = vector.load %arg2[%c0_8, %c0_9] : memref<1x128xf32, #tpu.memory_space<vmem>>, vector<1x128xf32>
    %18 = arith.mulf %16, %17 : vector<1x128xf32>
    %c0_10 = arith.constant 0 : index
    %c0_11 = arith.constant 0 : index
    %19 = vector.load %arg3[%c0_10, %c0_11] : memref<1x128xf32, #tpu.memory_space<vmem>>, vector<1x128xf32>
    %20 = arith.mulf %6, %18 : vector<1x128xf32>
    %21 = arith.subf %19, %20 : vector<1x128xf32>
    %22 = vector.broadcast %18 : vector<1x128xf32> to vector<8x128xf32>
    %23 = arith.mulf %2, %22 : vector<8x128xf32>
    %24 = vector.broadcast %21 : vector<1x128xf32> to vector<8x128xf32>
    %25 = arith.addf %23, %24 : vector<8x128xf32>
    %cst_12 = arith.constant 0.000000e+00 : f32
    %26 = vector.broadcast %cst_12 : f32 to vector<8x128xf32>
    %27 = arith.maximumf %25, %26 : vector<8x128xf32>
    %c0_13 = arith.constant 0 : index
    %c0_14 = arith.constant 0 : index
    %28 = vector.load %arg4[%c0_13, %c0_14] : memref<128x128xf32, #tpu.memory_space<vmem>>, vector<128x128xf32>
    %cst_15 = arith.constant dense<0.000000e+00> : vector<8x128xf32>
    %29 = tpu.matmul %27, %28, %cst_15 {dimension_numbers = #tpu.dot_dimension_numbers<[1], [0], [0], [1], [0, 0, 1, 1], [], []>} : vector<8x128xf32>, vector<128x128xf32>, vector<8x128xf32> -> vector<8x128xf32>
    %cst_16 = arith.constant dense<0.000000e+00> : vector<128xf32>
    %30 = vector.multi_reduction <add>, %29, %cst_16 [0] : vector<8x128xf32> to vector<128xf32>
    %31 = vector.shape_cast %30 : vector<128xf32> to vector<1x128xf32>
    %cst_17 = arith.constant 1.250000e-01 : f32
    %32 = vector.broadcast %cst_17 : f32 to vector<1x128xf32>
    %33 = arith.mulf %31, %32 : vector<1x128xf32>
    %34 = arith.mulf %29, %29 : vector<8x128xf32>
    %cst_18 = arith.constant dense<0.000000e+00> : vector<128xf32>
    %35 = vector.multi_reduction <add>, %34, %cst_18 [0] : vector<8x128xf32> to vector<128xf32>
    %36 = vector.shape_cast %35 : vector<128xf32> to vector<1x128xf32>
    %cst_19 = arith.constant 1.250000e-01 : f32
    %37 = vector.broadcast %cst_19 : f32 to vector<1x128xf32>
    %38 = arith.mulf %36, %37 : vector<1x128xf32>
    %39 = arith.mulf %33, %33 : vector<1x128xf32>
    %40 = arith.subf %38, %39 : vector<1x128xf32>
    %cst_20 = arith.constant 9.99999974E-6 : f32
    %41 = vector.broadcast %cst_20 : f32 to vector<1x128xf32>
    %42 = arith.addf %40, %41 : vector<1x128xf32>
    %43 = math.rsqrt %42 : vector<1x128xf32>
    %c0_21 = arith.constant 0 : index
    %c0_22 = arith.constant 0 : index
    %44 = vector.load %arg5[%c0_21, %c0_22] : memref<1x128xf32, #tpu.memory_space<vmem>>, vector<1x128xf32>
    %45 = arith.mulf %43, %44 : vector<1x128xf32>
    %c0_23 = arith.constant 0 : index
    %c0_24 = arith.constant 0 : index
    %46 = vector.load %arg6[%c0_23, %c0_24] : memref<1x128xf32, #tpu.memory_space<vmem>>, vector<1x128xf32>
    %47 = arith.mulf %33, %45 : vector<1x128xf32>
    %48 = arith.subf %46, %47 : vector<1x128xf32>
    %49 = vector.broadcast %45 : vector<1x128xf32> to vector<8x128xf32>
    %50 = arith.mulf %29, %49 : vector<8x128xf32>
    %51 = vector.broadcast %48 : vector<1x128xf32> to vector<8x128xf32>
    %52 = arith.addf %50, %51 : vector<8x128xf32>
    %cst_25 = arith.constant 0.000000e+00 : f32
    %53 = vector.broadcast %cst_25 : f32 to vector<8x128xf32>
    %54 = arith.maximumf %52, %53 : vector<8x128xf32>
    %c0_26 = arith.constant 0 : index
    %c0_27 = arith.constant 0 : index
    %55 = vector.load %arg7[%c0_26, %c0_27] : memref<128x128xf32, #tpu.memory_space<vmem>>, vector<128x128xf32>
    %cst_28 = arith.constant dense<0.000000e+00> : vector<8x128xf32>
    %56 = tpu.matmul %54, %55, %cst_28 {dimension_numbers = #tpu.dot_dimension_numbers<[1], [0], [0], [1], [0, 0, 1, 1], [], []>} : vector<8x128xf32>, vector<128x128xf32>, vector<8x128xf32> -> vector<8x128xf32>
    %cst_29 = arith.constant dense<0.000000e+00> : vector<128xf32>
    %57 = vector.multi_reduction <add>, %56, %cst_29 [0] : vector<8x128xf32> to vector<128xf32>
    %58 = vector.shape_cast %57 : vector<128xf32> to vector<1x128xf32>
    %cst_30 = arith.constant 1.250000e-01 : f32
    %59 = vector.broadcast %cst_30 : f32 to vector<1x128xf32>
    %60 = arith.mulf %58, %59 : vector<1x128xf32>
    %61 = arith.mulf %56, %56 : vector<8x128xf32>
    %cst_31 = arith.constant dense<0.000000e+00> : vector<128xf32>
    %62 = vector.multi_reduction <add>, %61, %cst_31 [0] : vector<8x128xf32> to vector<128xf32>
    %63 = vector.shape_cast %62 : vector<128xf32> to vector<1x128xf32>
    %cst_32 = arith.constant 1.250000e-01 : f32
    %64 = vector.broadcast %cst_32 : f32 to vector<1x128xf32>
    %65 = arith.mulf %63, %64 : vector<1x128xf32>
    %66 = arith.mulf %60, %60 : vector<1x128xf32>
    %67 = arith.subf %65, %66 : vector<1x128xf32>
    %cst_33 = arith.constant 9.99999974E-6 : f32
    %68 = vector.broadcast %cst_33 : f32 to vector<1x128xf32>
    %69 = arith.addf %67, %68 : vector<1x128xf32>
    %70 = math.rsqrt %69 : vector<1x128xf32>
    %c0_34 = arith.constant 0 : index
    %c0_35 = arith.constant 0 : index
    %71 = vector.load %arg8[%c0_34, %c0_35] : memref<1x128xf32, #tpu.memory_space<vmem>>, vector<1x128xf32>
    %72 = arith.mulf %70, %71 : vector<1x128xf32>
    %c0_36 = arith.constant 0 : index
    %c0_37 = arith.constant 0 : index
    %73 = vector.load %arg9[%c0_36, %c0_37] : memref<1x128xf32, #tpu.memory_space<vmem>>, vector<1x128xf32>
    %74 = arith.mulf %60, %72 : vector<1x128xf32>
    %75 = arith.subf %73, %74 : vector<1x128xf32>
    %76 = vector.broadcast %72 : vector<1x128xf32> to vector<8x128xf32>
    %77 = arith.mulf %56, %76 : vector<8x128xf32>
    %78 = vector.broadcast %75 : vector<1x128xf32> to vector<8x128xf32>
    %79 = arith.addf %77, %78 : vector<8x128xf32>
    %c0_38 = arith.constant 0 : index
    %c0_39 = arith.constant 0 : index
    %80 = vector.load %arg10[%c0_38, %c0_39] : memref<8x128xf32, #tpu.memory_space<vmem>>, vector<8x128xf32>
    tpu.vector_store %arg10[%c0_38, %c0_39], %79 {strides = array<i32>} : memref<8x128xf32, #tpu.memory_space<vmem>>, vector<8x128xf32>,
    return
  }
}

</mosaic_0001>

<llo_original>
// kernel: projector_forward.1
$region0: #{projector_forward.1}
  #allocation0 [shape = 'u32[]', space=smem, size = 0x4, offset = 0x4, fixed_abs, tag = 'smem constant byte address 0x4 - core index']
  #allocation1 [shape = 'u32[144,128]{1,0:T(1,128)}', space=vmem, size = 0x12000, scoped, tag = 'internal scratch']
  %s0 = inlined_call_operand.vmem [shape: f32[8,128], index: 0, kind: input, shape index: {}]
  %s1 = inlined_call_operand.vmem [shape: f32[128,128], index: 1, kind: input, shape index: {}]
  %s2 = inlined_call_operand.vmem [shape: f32[1,128], index: 2, kind: input, shape index: {}]
  %s3 = inlined_call_operand.vmem [shape: f32[1,128], index: 3, kind: input, shape index: {}]
  %s4 = inlined_call_operand.vmem [shape: f32[128,128], index: 4, kind: input, shape index: {}]
  %s5 = inlined_call_operand.vmem [shape: f32[1,128], index: 5, kind: input, shape index: {}]
  %s6 = inlined_call_operand.vmem [shape: f32[1,128], index: 6, kind: input, shape index: {}]
  %s7 = inlined_call_operand.vmem [shape: f32[128,128], index: 7, kind: input, shape index: {}]
  %s8 = inlined_call_operand.vmem [shape: f32[1,128], index: 8, kind: input, shape index: {}]
  %s9 = inlined_call_operand.vmem [shape: f32[1,128], index: 9, kind: input, shape index: {}]
  %s10 = inlined_call_operand.hbm [shape: f32[8,128], index: 10, kind: output, shape index: {}]
  %s11 = sld [smem:[#allocation0]]
  $region50: #{projector_forward.1} parent=0
    _
  %s13 = ssub.s32 1, %s11
  %s14 = scalar_select 0, %s13, %s11
  $region1: #{projector_forward.1} parent=0
    #allocation2 [shape = 'u8[4096]{0}', space=vmem, size = 0x1000, scoped, tag = 'output window, operand 0, single buffered']
    #allocation3 [shape = 's32[1]{0}', space=sflag, size = 0x4, scoped, tag = 'scoped memory for projector_forward.1']
    %15 = vsyncpa [#allocation3], 0
    // Predicated region
    $region2: #{projector_forward.1} parent=1 // pred_check
      _
    $region3: #{projector_forward.1} parent=1 // pred_check_branch
      %17 = sbr.rel (0) target = $region5
    $region4: #{projector_forward.1} parent=1 // pred_region
      _
    $region5: #{projector_forward.1} parent=1 // pred_fallthru
      _
    // Predicated region
    $region6: #{projector_forward.1} parent=1 // pred_check
      _
    $region7: #{projector_forward.1} parent=1 // pred_check_branch
      %19 = sbr.rel (0) target = $region9
    $region8: #{projector_forward.1} parent=1 // pred_region
      _
    $region9: #{projector_forward.1} parent=1 // pred_fallthru
      _
    // Predicated region
    $region10: #{projector_forward.1} parent=1 // pred_check
      _
    $region11: #{projector_forward.1} parent=1 // pred_check_branch
      %21 = sbr.rel (0) target = $region13
    $region12: #{projector_forward.1} parent=1 // pred_region
      _
    $region13: #{projector_forward.1} parent=1 // pred_fallthru
      _
    // Predicated region
    $region14: #{projector_forward.1} parent=1 // pred_check
      _
    $region15: #{projector_forward.1} parent=1 // pred_check_branch
      %23 = sbr.rel (0) target = $region17
    $region16: #{projector_forward.1} parent=1 // pred_region
      _
    $region17: #{projector_forward.1} parent=1 // pred_fallthru
      _
    // Predicated region
    $region18: #{projector_forward.1} parent=1 // pred_check
      _
    $region19: #{projector_forward.1} parent=1 // pred_check_branch
      %25 = sbr.rel (0) target = $region21
    $region20: #{projector_forward.1} parent=1 // pred_region
      _
    $region21: #{projector_forward.1} parent=1 // pred_fallthru
      _
    // Predicated region
    $region22: #{projector_forward.1} parent=1 // pred_check
      _
    $region23: #{projector_forward.1} parent=1 // pred_check_branch
      %27 = sbr.rel (0) target = $region25
    $region24: #{projector_forward.1} parent=1 // pred_region
      _
    $region25: #{projector_forward.1} parent=1 // pred_fallthru
      _
    // Predicated region
    $region26: #{projector_forward.1} parent=1 // pred_check
      _
    $region27: #{projector_forward.1} parent=1 // pred_check_branch
      %29 = sbr.rel (0) target = $region29
    $region28: #{projector_forward.1} parent=1 // pred_region
      _
    $region29: #{projector_forward.1} parent=1 // pred_fallthru
      _
    // Predicated region
    $region30: #{projector_forward.1} parent=1 // pred_check
      _
    $region31: #{projector_forward.1} parent=1 // pred_check_branch
      %31 = sbr.rel (0) target = $region33
    $region32: #{projector_forward.1} parent=1 // pred_region
      _
    $region33: #{projector_forward.1} parent=1 // pred_fallthru
      _
    // Predicated region
    $region34: #{projector_forward.1} parent=1 // pred_check
      _
    $region35: #{projector_forward.1} parent=1 // pred_check_branch
      %33 = sbr.rel (0) target = $region37
    $region36: #{projector_forward.1} parent=1 // pred_region
      _
    $region37: #{projector_forward.1} parent=1 // pred_fallthru
      _
    // Predicated region
    $region38: #{projector_forward.1} parent=1 // pred_check
      _
    $region39: #{projector_forward.1} parent=1 // pred_check_branch
      %35 = sbr.rel (0) target = $region41
    $region40: #{projector_forward.1} parent=1 // pred_region
      _
    $region41: #{projector_forward.1} parent=1 // pred_fallthru
      _
    %v36 = vld [vmem:[%s0] sm:$0xff]
    %v37 = vld [vmem:[%s1] sm:$0xff]
    %v38 = vld [vmem:[%s1 + $0x8] sm:$0xff]
    %v39 = vld [vmem:[%s1 + $0x10] sm:$0xff]
    %v40 = vld [vmem:[%s1 + $0x18] sm:$0xff]
    %v41 = vld [vmem:[%s1 + $0x20] sm:$0xff]
    %v42 = vld [vmem:[%s1 + $0x28] sm:$0xff]
    %v43 = vld [vmem:[%s1 + $0x30] sm:$0xff]
    %v44 = vld [vmem:[%s1 + $0x38] sm:$0xff]
    %v45 = vld [vmem:[%s1 + $0x40] sm:$0xff]
    %v46 = vld [vmem:[%s1 + $0x48] sm:$0xff]
    %v47 = vld [vmem:[%s1 + $0x50] sm:$0xff]
    %v48 = vld [vmem:[%s1 + $0x58] sm:$0xff]
    %v49 = vld [vmem:[%s1 + $0x60] sm:$0xff]
    %v50 = vld [vmem:[%s1 + $0x68] sm:$0xff]
    %v51 = vld [vmem:[%s1 + $0x70] sm:$0xff]
    %v52 = vld [vmem:[%s1 + $0x78] sm:$0xff]
    %53 = vmatprep.subr.mxu0 0.0
    %54 = vmatpush1.msra.mxu0 %v37
    %55 = vmatprep.subr.mxu0 0.0
    %56 = vmatpush1.msra.mxu0 %v38
    %57 = vmatprep.subr.mxu0 0.0
    %58 = vmatpush1.msra.mxu0 %v39
    %59 = vmatprep.subr.mxu0 0.0
    %60 = vmatpush1.msra.mxu0 %v40
    %61 = vmatprep.subr.mxu0 0.0
    %62 = vmatpush1.msra.mxu0 %v41
    %63 = vmatprep.subr.mxu0 0.0
    %64 = vmatpush1.msra.mxu0 %v42
    %65 = vmatprep.subr.mxu0 0.0
    %66 = vmatpush1.msra.mxu0 %v43
    %67 = vmatprep.subr.mxu0 0.0
    %68 = vmatpush1.msra.mxu0 %v44
    %69 = vmatprep.subr.mxu0 0.0
    %70 = vmatpush1.msra.mxu0 %v45
    %71 = vmatprep.subr.mxu0 0.0
    %72 = vmatpush1.msra.mxu0 %v46
    %73 = vmatprep.subr.mxu0 0.0
    %74 = vmatpush1.msra.mxu0 %v47
    %75 = vmatprep.subr.mxu0 0.0
    %76 = vmatpush1.msra.mxu0 %v48
    %77 = vmatprep.subr.mxu0 0.0
    %78 = vmatpush1.msra.mxu0 %v49
    %79 = vmatprep.subr.mxu0 0.0
    %80 = vmatpush1.msra.mxu0 %v50
    %81 = vmatprep.subr.mxu0 0.0
    %82 = vmatpush1.msra.mxu0 %v51
    %83 = vmatprep.subr.mxu0 0.0
    %84 = vmatpush1.msra.mxu0 %v52
    %85 = vmatprep.subr.mxu0 0.0
    %86 = vmatpush1.msra.mxu0 0.0
    %87 = vmatprep.subr.mxu0 0.0
    %88 = vmatpush1.msra.mxu0 0.0
    %89 = vmatprep.subr.mxu0 0.0
    %90 = vmatpush1.msra.mxu0 0.0
    %91 = vmatprep.subr.mxu0 0.0
    %92 = vmatpush1.msra.mxu0 0.0
    %93 = vmatprep.subr.mxu0 0.0
    %94 = vmatpush1.msra.mxu0 0.0
    %95 = vmatprep.subr.mxu0 0.0
    %96 = vmatpush1.msra.mxu0 0.0
    %97 = vmatprep.subr.mxu0 0.0
    %98 = vmatpush1.msra.mxu0 0.0
    %99 = vmatprep.subr.mxu0 0.0
    %100 = vmatpush1.msra.mxu0 0.0
    %101 = vmatprep.subr.mxu0 0.0
    %102 = vmatpush1.msra.mxu0 0.0
    %103 = vmatprep.subr.mxu0 0.0
    %104 = vmatpush1.msra.mxu0 0.0
    %105 = vmatprep.subr.mxu0 0.0
    %106 = vmatpush1.msra.mxu0 0.0
    %107 = vmatprep.subr.mxu0 0.0
    %108 = vmatpush1.msra.mxu0 0.0
    %109 = vmatprep.subr.mxu0 0.0
    %110 = vmatpush1.msra.mxu0 0.0
    %111 = vmatprep.subr.mxu0 0.0
    %112 = vmatpush1.msra.mxu0 0.0
    %113 = vmatprep.subr.mxu0 0.0
    %114 = vmatpush1.msra.mxu0 0.0
    %115 = vmatprep.subr.mxu0 0.0
    %116 = vmatpush1.msra.mxu0 0.0
    %117 = vmatprep.mubr.f32.mxu0 0.0
    %118 = vmatmul.mubr.f32.gmra.mrb[0].mxu0 %v36
    %v119 = vpop.f32.mrb[0].mxu0
    %v120 = vadd.f32 0.0, %v119
    %v121 = vpop.f32.mrb[0].mxu0
    %122 = vdwg.mxu0
    %v123 = vrot.slane %v120, 4
    %v124 = vadd.f32 %v120, %v123
    %v125 = vrot.slane %v124, 2
    %v126 = vadd.f32 %v124, %v125
    %v127 = vrot.slane %v126, 1
    %v128 = vadd.f32 %v126, %v127
    %v129 = vmul.f32 %v128, 0.125
    %v130 = vmul.f32 %v120, %v120
    %v131 = vrot.slane %v130, 4
    %v132 = vadd.f32 %v130, %v131
    %v133 = vrot.slane %v132, 2
    %v134 = vadd.f32 %v132, %v133
    %v135 = vrot.slane %v134, 1
    %v136 = vadd.f32 %v134, %v135
    %v137 = vmul.f32 %v136, 0.125
    %v138 = vmul.f32 %v129, %v129
    %v139 = vsub.f32 %v137, %v138
    %v140 = vadd.f32 %v139, 1e-05
    %v141 = vrsqrt.pop %v140
    %v142 = vld [vmem:[%s2] sm:$0x1]
    %v143 = vmul.f32 %v141, %v142
    %v144 = vld [vmem:[%s3] sm:$0x1]
    %v145 = vmul.f32 %v129, %v143
    %v146 = vsub.f32 %v144, %v145
    %v147 = vlaneseq
    %v148 = vshrl.u32 %v147, 7
    %v149 = vsub.s32 0, %v148
    %v150 = vrot.slane %v143, %v149
    %v151 = vmul.f32 %v120, %v150
    %v153 = vlaneseq
    %v154 = vshrl.u32 %v153, 7
    %v155 = vsub.s32 0, %v154
    %v156 = vrot.slane %v146, %v155
    %v158 = vadd.f32 %v151, %v156
    %v159 = vmax.f32 %v158, 0.0
    %v160 = vld [vmem:[%s4] sm:$0xff]
    %v161 = vld [vmem:[%s4 + $0x8] sm:$0xff]
    %v162 = vld [vmem:[%s4 + $0x10] sm:$0xff]
    %v163 = vld [vmem:[%s4 + $0x18] sm:$0xff]
    %v164 = vld [vmem:[%s4 + $0x20] sm:$0xff]
    %v165 = vld [vmem:[%s4 + $0x28] sm:$0xff]
    %v166 = vld [vmem:[%s4 + $0x30] sm:$0xff]
    %v167 = vld [vmem:[%s4 + $0x38] sm:$0xff]
    %v168 = vld [vmem:[%s4 + $0x40] sm:$0xff]
    %v169 = vld [vmem:[%s4 + $0x48] sm:$0xff]
    %v170 = vld [vmem:[%s4 + $0x50] sm:$0xff]
    %v171 = vld [vmem:[%s4 + $0x58] sm:$0xff]
    %v172 = vld [vmem:[%s4 + $0x60] sm:$0xff]
    %v173 = vld [vmem:[%s4 + $0x68] sm:$0xff]
    %v174 = vld [vmem:[%s4 + $0x70] sm:$0xff]
    %v175 = vld [vmem:[%s4 + $0x78] sm:$0xff]
    %176 = vmatprep.subr.mxu0 0.0
    %177 = vmatpush1.msra.mxu0 %v160
    %178 = vmatprep.subr.mxu0 0.0
    %179 = vmatpush1.msra.mxu0 %v161
    %180 = vmatprep.subr.mxu0 0.0
    %181 = vmatpush1.msra.mxu0 %v162
    %182 = vmatprep.subr.mxu0 0.0
    %183 = vmatpush1.msra.mxu0 %v163
    %184 = vmatprep.subr.mxu0 0.0
    %185 = vmatpush1.msra.mxu0 %v164
    %186 = vmatprep.subr.mxu0 0.0
    %187 = vmatpush1.msra.mxu0 %v165
    %188 = vmatprep.subr.mxu0 0.0
    %189 = vmatpush1.msra.mxu0 %v166
    %190 = vmatprep.subr.mxu0 0.0
    %191 = vmatpush1.msra.mxu0 %v167
    %192 = vmatprep.subr.mxu0 0.0
    %193 = vmatpush1.msra.mxu0 %v168
    %194 = vmatprep.subr.mxu0 0.0
    %195 = vmatpush1.msra.mxu0 %v169
    %196 = vmatprep.subr.mxu0 0.0
    %197 = vmatpush1.msra.mxu0 %v170
    %198 = vmatprep.subr.mxu0 0.0
    %199 = vmatpush1.msra.mxu0 %v171
    %200 = vmatprep.subr.mxu0 0.0
    %201 = vmatpush1.msra.mxu0 %v172
    %202 = vmatprep.subr.mxu0 0.0
    %203 = vmatpush1.msra.mxu0 %v173
    %204 = vmatprep.subr.mxu0 0.0
    %205 = vmatpush1.msra.mxu0 %v174
    %206 = vmatprep.subr.mxu0 0.0
    %207 = vmatpush1.msra.mxu0 %v175
    %208 = vmatprep.subr.mxu0 0.0
    %209 = vmatpush1.msra.mxu0 0.0
    %210 = vmatprep.subr.mxu0 0.0
    %211 = vmatpush1.msra.mxu0 0.0
    %212 = vmatprep.subr.mxu0 0.0
    %213 = vmatpush1.msra.mxu0 0.0
    %214 = vmatprep.subr.mxu0 0.0
    %215 = vmatpush1.msra.mxu0 0.0
    %216 = vmatprep.subr.mxu0 0.0
    %217 = vmatpush1.msra.mxu0 0.0
    %218 = vmatprep.subr.mxu0 0.0
    %219 = vmatpush1.msra.mxu0 0.0
    %220 = vmatprep.subr.mxu0 0.0
    %221 = vmatpush1.msra.mxu0 0.0
    %222 = vmatprep.subr.mxu0 0.0
    %223 = vmatpush1.msra.mxu0 0.0
    %224 = vmatprep.subr.mxu0 0.0
    %225 = vmatpush1.msra.mxu0 0.0
    %226 = vmatprep.subr.mxu0 0.0
    %227 = vmatpush1.msra.mxu0 0.0
    %228 = vmatprep.subr.mxu0 0.0
    %229 = vmatpush1.msra.mxu0 0.0
    %230 = vmatprep.subr.mxu0 0.0
    %231 = vmatpush1.msra.mxu0 0.0
    %232 = vmatprep.subr.mxu0 0.0
    %233 = vmatpush1.msra.mxu0 0.0
    %234 = vmatprep.subr.mxu0 0.0
    %235 = vmatpush1.msra.mxu0 0.0
    %236 = vmatprep.subr.mxu0 0.0
    %237 = vmatpush1.msra.mxu0 0.0
    %238 = vmatprep.subr.mxu0 0.0
    %239 = vmatpush1.msra.mxu0 0.0
    %240 = vmatprep.mubr.f32.mxu0 0.0
    %241 = vmatmul.mubr.f32.gmra.mrb[0].mxu0 %v159
    %v242 = vpop.f32.mrb[0].mxu0
    %v243 = vadd.f32 0.0, %v242
    %v244 = vpop.f32.mrb[0].mxu0
    %245 = vdwg.mxu0
    %v246 = vrot.slane %v243, 4
    %v247 = vadd.f32 %v243, %v246
    %v248 = vrot.slane %v247, 2
    %v249 = vadd.f32 %v247, %v248
    %v250 = vrot.slane %v249, 1
    %v251 = vadd.f32 %v249, %v250
    %v252 = vmul.f32 %v251, 0.125
    %v253 = vmul.f32 %v243, %v243
    %v254 = vrot.slane %v253, 4
    %v255 = vadd.f32 %v253, %v254
    %v256 = vrot.slane %v255, 2
    %v257 = vadd.f32 %v255, %v256
    %v258 = vrot.slane %v257, 1
    %v259 = vadd.f32 %v257, %v258
    %v260 = vmul.f32 %v259, 0.125
    %v261 = vmul.f32 %v252, %v252
    %v262 = vsub.f32 %v260, %v261
    %v263 = vadd.f32 %v262, 1e-05
    %v264 = vrsqrt.pop %v263
    %v265 = vld [vmem:[%s5] sm:$0x1]
    %v266 = vmul.f32 %v264, %v265
    %v267 = vld [vmem:[%s6] sm:$0x1]
    %v268 = vmul.f32 %v252, %v266
    %v269 = vsub.f32 %v267, %v268
    %v270 = vlaneseq
    %v271 = vshrl.u32 %v270, 7
    %v272 = vsub.s32 0, %v271
    %v273 = vrot.slane %v266, %v272
    %v274 = vmul.f32 %v243, %v273
    %v276 = vlaneseq
    %v277 = vshrl.u32 %v276, 7
    %v278 = vsub.s32 0, %v277
    %v279 = vrot.slane %v269, %v278
    %v281 = vadd.f32 %v274, %v279
    %v282 = vmax.f32 %v281, 0.0
    %v283 = vld [vmem:[%s7] sm:$0xff]
    %v284 = vld [vmem:[%s7 + $0x8] sm:$0xff]
    %v285 = vld [vmem:[%s7 + $0x10] sm:$0xff]
    %v286 = vld [vmem:[%s7 + $0x18] sm:$0xff]
    %v287 = vld [vmem:[%s7 + $0x20] sm:$0xff]
    %v288 = vld [vmem:[%s7 + $0x28] sm:$0xff]
    %v289 = vld [vmem:[%s7 + $0x30] sm:$0xff]
    %v290 = vld [vmem:[%s7 + $0x38] sm:$0xff]
    %v291 = vld [vmem:[%s7 + $0x40] sm:$0xff]
    %v292 = vld [vmem:[%s7 + $0x48] sm:$0xff]
    %v293 = vld [vmem:[%s7 + $0x50] sm:$0xff]
    %v294 = vld [vmem:[%s7 + $0x58] sm:$0xff]
    %v295 = vld [vmem:[%s7 + $0x60] sm:$0xff]
    %v296 = vld [vmem:[%s7 + $0x68] sm:$0xff]
    %v297 = vld [vmem:[%s7 + $0x70] sm:$0xff]
    %v298 = vld [vmem:[%s7 + $0x78] sm:$0xff]
    %299 = vmatprep.subr.mxu0 0.0
    %300 = vmatpush1.msra.mxu0 %v283
    %301 = vmatprep.subr.mxu0 0.0
    %302 = vmatpush1.msra.mxu0 %v284
    %303 = vmatprep.subr.mxu0 0.0
    %304 = vmatpush1.msra.mxu0 %v285
    %305 = vmatprep.subr.mxu0 0.0
    %306 = vmatpush1.msra.mxu0 %v286
    %307 = vmatprep.subr.mxu0 0.0
    %308 = vmatpush1.msra.mxu0 %v287
    %309 = vmatprep.subr.mxu0 0.0
    %310 = vmatpush1.msra.mxu0 %v288
    %311 = vmatprep.subr.mxu0 0.0
    %312 = vmatpush1.msra.mxu0 %v289
    %313 = vmatprep.subr.mxu0 0.0
    %314 = vmatpush1.msra.mxu0 %v290
    %315 = vmatprep.subr.mxu0 0.0
    %316 = vmatpush1.msra.mxu0 %v291
    %317 = vmatprep.subr.mxu0 0.0
    %318 = vmatpush1.msra.mxu0 %v292
    %319 = vmatprep.subr.mxu0 0.0
    %320 = vmatpush1.msra.mxu0 %v293
    %321 = vmatprep.subr.mxu0 0.0
    %322 = vmatpush1.msra.mxu0 %v294
    %323 = vmatprep.subr.mxu0 0.0
    %324 = vmatpush1.msra.mxu0 %v295
    %325 = vmatprep.subr.mxu0 0.0
    %326 = vmatpush1.msra.mxu0 %v296
    %327 = vmatprep.subr.mxu0 0.0
    %328 = vmatpush1.msra.mxu0 %v297
    %329 = vmatprep.subr.mxu0 0.0
    %330 = vmatpush1.msra.mxu0 %v298
    %331 = vmatprep.subr.mxu0 0.0
    %332 = vmatpush1.msra.mxu0 0.0
    %333 = vmatprep.subr.mxu0 0.0
    %334 = vmatpush1.msra.mxu0 0.0
    %335 = vmatprep.subr.mxu0 0.0
    %336 = vmatpush1.msra.mxu0 0.0
    %337 = vmatprep.subr.mxu0 0.0
    %338 = vmatpush1.msra.mxu0 0.0
    %339 = vmatprep.subr.mxu0 0.0
    %340 = vmatpush1.msra.mxu0 0.0
    %341 = vmatprep.subr.mxu0 0.0
    %342 = vmatpush1.msra.mxu0 0.0
    %343 = vmatprep.subr.mxu0 0.0
    %344 = vmatpush1.msra.mxu0 0.0
    %345 = vmatprep.subr.mxu0 0.0
    %346 = vmatpush1.msra.mxu0 0.0
    %347 = vmatprep.subr.mxu0 0.0
    %348 = vmatpush1.msra.mxu0 0.0
    %349 = vmatprep.subr.mxu0 0.0
    %350 = vmatpush1.msra.mxu0 0.0
    %351 = vmatprep.subr.mxu0 0.0
    %352 = vmatpush1.msra.mxu0 0.0
    %353 = vmatprep.subr.mxu0 0.0
    %354 = vmatpush1.msra.mxu0 0.0
    %355 = vmatprep.subr.mxu0 0.0
    %356 = vmatpush1.msra.mxu0 0.0
    %357 = vmatprep.subr.mxu0 0.0
    %358 = vmatpush1.msra.mxu0 0.0
    %359 = vmatprep.subr.mxu0 0.0
    %360 = vmatpush1.msra.mxu0 0.0
    %361 = vmatprep.subr.mxu0 0.0
    %362 = vmatpush1.msra.mxu0 0.0
    %363 = vmatprep.mubr.f32.mxu0 0.0
    %364 = vmatmul.mubr.f32.gmra.mrb[0].mxu0 %v282
    %v365 = vpop.f32.mrb[0].mxu0
    %v366 = vadd.f32 0.0, %v365
    %v367 = vpop.f32.mrb[0].mxu0
    %368 = vdwg.mxu0
    %v369 = vrot.slane %v366, 4
    %v370 = vadd.f32 %v366, %v369
    %v371 = vrot.slane %v370, 2
    %v372 = vadd.f32 %v370, %v371
    %v373 = vrot.slane %v372, 1
    %v374 = vadd.f32 %v372, %v373
    %v375 = vmul.f32 %v374, 0.125
    %v376 = vmul.f32 %v366, %v366
    %v377 = vrot.slane %v376, 4
    %v378 = vadd.f32 %v376, %v377
    %v379 = vrot.slane %v378, 2
    %v380 = vadd.f32 %v378, %v379
    %v381 = vrot.slane %v380, 1
    %v382 = vadd.f32 %v380, %v381
    %v383 = vmul.f32 %v382, 0.125
    %v384 = vmul.f32 %v375, %v375
    %v385 = vsub.f32 %v383, %v384
    %v386 = vadd.f32 %v385, 1e-05
    %v387 = vrsqrt.pop %v386
    %v388 = vld [vmem:[%s8] sm:$0x1]
    %v389 = vmul.f32 %v387, %v388
    %v390 = vld [vmem:[%s9] sm:$0x1]
    %v391 = vmul.f32 %v375, %v389
    %v392 = vsub.f32 %v390, %v391
    %v393 = vlaneseq
    %v394 = vshrl.u32 %v393, 7
    %v395 = vsub.s32 0, %v394
    %v396 = vrot.slane %v389, %v395
    %v397 = vmul.f32 %v366, %v396
    %v399 = vlaneseq
    %v400 = vshrl.u32 %v399, 7
    %v401 = vsub.s32 0, %v400
    %v402 = vrot.slane %v392, %v401
    %v404 = vadd.f32 %v397, %v402
    %405 = vst [vmem:[#allocation2] sm:$0xff] %v404
    // Predicated region
    $region42: #{projector_forward.1} parent=1 // pred_check
      _
    $region43: #{projector_forward.1} parent=1 // pred_check_branch
      %407 = sbr.rel (0) target = $region45
    $region44: #{projector_forward.1} parent=1 // pred_region
      %s409 = ssub.s32 128, 128
      %410 = vsyncadd [#allocation3], %s409
      %s412 = sshll.u32 [#allocation2], 4
      %s413 = int_to_ptr.vmem [resolvable:$true] %s412
      %415 = dma.vmem_to_hbm [thread:$0]  %s413, 128, %s10, [#allocation3]
    $region45: #{projector_forward.1} parent=1 // pred_fallthru
      _
    // Predicated region
    $region46: #{projector_forward.1} parent=1 // pred_check
      _
    $region47: #{projector_forward.1} parent=1 // pred_check_branch
      %417 = sbr.rel (0) target = $region49
    $region48: #{projector_forward.1} parent=1 // pred_region
      %418 = dma.done [#allocation3], 128
    $region49: #{projector_forward.1} parent=1 // pred_fallthru
      _
    %419 = vsyncpa [#allocation3], 1

</llo_original>
